<compile_context>
chip_gen: v6e
topology: v6e:2x2x1
jax: 0.10.0
libtpu: 0.0.40
codegen_flags: <defaults>
</compile_context>

<pallas_src>
import functools

import jax
import jax.numpy as jnp
from jax.experimental import pallas as pl
from jax.experimental.pallas import tpu as pltpu


def _round_up(x: int, m: int) -> int:
    return ((x + m - 1) // m) * m


# ----------------------------------------------------------------------------
# Fused multi-layer LSTM step kernel: ONE invocation == the whole L-layer step.
# ----------------------------------------------------------------------------
def _fused_lstm_kernel(x_ref, h_prev_ref, c_prev_ref, w_ref, b_ref,
                       h_out_ref, c_out_ref, xin_ref, *,
                       num_layers, hidden, k_pad):
    # Seed the layer-input slot once with the (zero-padded) x.
    xin_ref[:, :k_pad] = x_ref[...].astype(xin_ref.dtype)

    # Hoisted g-gate lane mask (JAX does not CSE broadcasts inside loops).
    lane = jax.lax.broadcasted_iota(jnp.int32, (x_ref.shape[0], 4 * hidden), 1)
    is_g = (lane >= 2 * hidden) & (lane < 3 * hidden)

    def layer_body(l, carry):
        # h slot <- h_prev[l]  (small (B, H) cast + lane-aligned slice store).
        xin_ref[:, k_pad:] = h_prev_ref[l].astype(xin_ref.dtype)

        # Merged matmul [x, h] @ W[l]: bf16 operands, f32 MXU accumulation.
        gates = jnp.dot(xin_ref[...], w_ref[l],
                        preferred_element_type=jnp.float32) + b_ref[l]  # (B, 4H)

        # Single EUP pass: sigmoid(z) = 0.5 * (1 + tanh(z / 2)).
        z = jnp.where(is_g, gates, 0.5 * gates)
        t = jnp.tanh(z)
        acts = jnp.where(is_g, t, 0.5 * t + 0.5)

        i_g = acts[:, 0 * hidden:1 * hidden]
        f_g = acts[:, 1 * hidden:2 * hidden]
        g_g = acts[:, 2 * hidden:3 * hidden]
        o_g = acts[:, 3 * hidden:4 * hidden]

        c_new = f_g * c_prev_ref[l] + i_g * g_g
        h_new = o_g * jnp.tanh(c_new)

        h_out_ref[l] = h_new
        c_out_ref[l] = c_new

        # Carry h as the next layer's input.  Lanes [hidden:k_pad] keep stale x
        # values, but the corresponding weight rows are zero for layers > 0.
        xin_ref[:, :hidden] = h_new.astype(xin_ref.dtype)
        return carry

    jax.lax.fori_loop(0, num_layers, layer_body, 0, unroll=True)


# ----------------------------------------------------------------------------
# Parameter init (mirrors LSTMController.reset_parameters) + offline packing.
# ----------------------------------------------------------------------------
def init_lstm_controller(key, num_inputs, num_outputs, num_layers,
                         weight_dtype=jnp.bfloat16):
    I, H, L = num_inputs, num_outputs, num_layers
    k_pad = _round_up(max(I, H), 128)      # lane-aligned width of the x/h slot
    stdev = 5.0 / (I + H) ** 0.5
    keys = jax.random.split(key, 2 * L + 2)

    raw_layers, w_blocks, b_blocks = [], [], []
    for l in range(L):
        in_dim = I if l == 0 else H
        w_ih = jax.random.uniform(keys[2 * l], (4 * H, in_dim),
                                  minval=-stdev, maxval=stdev, dtype=jnp.float32)
        w_hh = jax.random.uniform(keys[2 * l + 1], (4 * H, H),
                                  minval=-stdev, maxval=stdev, dtype=jnp.float32)
        b_ih = jnp.zeros((4 * H,), jnp.float32)      # nn.init.constant_(p, 0)
        b_hh = jnp.zeros((4 * H,), jnp.float32)
        raw_layers.append(dict(w_ih=w_ih, w_hh=w_hh, b_ih=b_ih, b_hh=b_hh))

        # Packed per-layer weight: rows [0:in_dim] = W_ih^T, rows [in_dim:k_pad]
        # ZERO (invariant the kernel's persistent scratch relies on),
        # rows [k_pad:k_pad+H] = W_hh^T.
        w_l = jnp.zeros((k_pad + H, 4 * H), jnp.float32)
        w_l = w_l.at[:in_dim, :].set(w_ih.T)
        w_l = w_l.at[k_pad:, :].set(w_hh.T)
        w_blocks.append(w_l)
        b_blocks.append((b_ih + b_hh).reshape(1, 4 * H))

    params = {
        "W": jnp.stack(w_blocks).astype(weight_dtype),   # (L, k_pad+H, 4H) bf16
        "b": jnp.stack(b_blocks),                        # (L, 1, 4H)      f32
        "lstm_h_bias": jax.random.normal(keys[-2], (L, 1, H), jnp.float32) * 0.05,
        "lstm_c_bias": jax.random.normal(keys[-1], (L, 1, H), jnp.float32) * 0.05,
        "raw_layers": raw_layers,                        # kept for reference check
    }
    return params


def create_new_state(params, batch_size):
    h = jnp.tile(params["lstm_h_bias"], (1, batch_size, 1))   # (L, B, H)
    c = jnp.tile(params["lstm_c_bias"], (1, batch_size, 1))   # (L, B, H)
    return h, c


# ----------------------------------------------------------------------------
# Forward: equivalent of LSTMController.forward (seq_len == 1).
# prev_state is donated so the kernel's input_output_aliases is a true in-place
# HBM update of the (h, c) state.
# ----------------------------------------------------------------------------
@functools.partial(jax.jit, donate_argnums=(2,))
def lstm_controller_forward(params, x, prev_state):
    h_prev, c_prev = prev_state                       # (L, B, H) f32 each
    L, B, H = h_prev.shape
    k_pad = params["W"].shape[1] - H
    if x.shape[1] < k_pad:                            # zero-pad layer-0 input (exact)
        x = jnp.pad(x, ((0, 0), (0, k_pad - x.shape[1])))

    kernel = functools.partial(_fused_lstm_kernel,
                               num_layers=L, hidden=H, k_pad=k_pad)

    # Single invocation: whole stacked weight (L*(k_pad+H)*4H*2 bytes) resident
    # in VMEM — fine for controller-sized LSTMs.
    # TODO(synk): for large H, switch back to grid=(L, K/tk) with a K-tiled
    # weight BlockSpec + f32 accumulator (fits v7x's 64 MiB VMEM), add a
    # 'parallel' batch-tile axis for v7x's 2nd TensorCore, and consider int8
    # weights on v5e/v6e (fp8 on v7x) if weight DMA becomes the roofline.
    h_out, c_out = pl.pallas_call(
        kernel,
        out_shape=(jax.ShapeDtypeStruct((L, B, H), jnp.float32),
                   jax.ShapeDtypeStruct((L, B, H), jnp.float32)),
        scratch_shapes=[pltpu.VMEM((B, k_pad + H), params["W"].dtype)],
        input_output_aliases={1: 0, 2: 1},            # h_prev -> h_out, c_prev -> c_out
    )(x, h_prev, c_prev, params["W"], params["b"])

    return h_out[L - 1], (h_out, c_out)


# ----------------------------------------------------------------------------
# Pure-JAX f32 reference (kernel stores weights in bf16 -> loose tolerance).
# ----------------------------------------------------------------------------
def lstm_controller_reference(params, x, prev_state):
    h_prev, c_prev = prev_state
    layer_in = x
    h_list, c_list = [], []
    for l, p in enumerate(params["raw_layers"]):
        H = p["w_hh"].shape[1]
        gates = (layer_in @ p["w_ih"].T + h_prev[l] @ p["w_hh"].T
                 + p["b_ih"] + p["b_hh"])
        i = jax.nn.sigmoid(gates[:, 0 * H:1 * H])
        f = jax.nn.sigmoid(gates[:, 1 * H:2 * H])
        g = jnp.tanh(gates[:, 2 * H:3 * H])
        o = jax.nn.sigmoid(gates[:, 3 * H:4 * H])
        c = f * c_prev[l] + i * g
        h = o * jnp.tanh(c)
        h_list.append(h)
        c_list.append(c)
        layer_in = h
    return layer_in, (jnp.stack(h_list), jnp.stack(c_list))


if __name__ == "__main__":
    NUM_INPUTS = 32
    NUM_OUTPUTS = 32
    NUM_LAYERS = 2
    BATCH = 8

    key = jax.random.PRNGKey(0)
    k_params, k_x = jax.random.split(key)
    params = init_lstm_controller(k_params, NUM_INPUTS, NUM_OUTPUTS, NUM_LAYERS)

    x = jax.random.normal(k_x, (BATCH, NUM_INPUTS), dtype=jnp.float32)

    # Reference uses its own (identical) state since the kernel's state is donated.
    state_for_ref = create_new_state(params, BATCH)
    out_ref, (h_ref, c_ref) = lstm_controller_reference(params, x, state_for_ref)
    jax.block_until_ready((out_ref, h_ref, c_ref))

    prev_state = create_new_state(params, BATCH)        # donated to the kernel
    out, (h_state, c_state) = lstm_controller_forward(params, x, prev_state)
    jax.block_until_ready((out, h_state, c_state))

    assert out.shape == (BATCH, NUM_OUTPUTS)
    assert h_state.shape == (NUM_LAYERS, BATCH, NUM_OUTPUTS)
    assert c_state.shape == (NUM_LAYERS, BATCH, NUM_OUTPUTS)

    # Structural correctness vs. the f32 reference (tolerance covers the bf16
    # weight storage; accumulation and all cell math are f32).
    for name, got, want in (("out", out, out_ref),
                            ("h", h_state, h_ref),
                            ("c", c_state, c_ref)):
        err = float(jnp.max(jnp.abs(got - want)))
        assert err < 1e-1, f"{name} max abs err {err}"

    print("KERNEL_OK")
</pallas_src>

<mosaic_0001>
module attributes {stable_mosaic.version = 11 : i64} {
  func.func @_fused_lstm_kernel(%arg0: memref<8x128xf32, #tpu.memory_space<vmem>>, %arg1: memref<2x8x32xf32, #tpu.memory_space<vmem>>, %arg2: memref<2x8x32xf32, #tpu.memory_space<vmem>>, %arg3: memref<2x160x128xbf16, #tpu.memory_space<vmem>>, %arg4: memref<2x1x128xf32, #tpu.memory_space<vmem>>, %arg5: memref<2x8x32xf32, #tpu.memory_space<vmem>>, %arg6: memref<2x8x32xf32, #tpu.memory_space<vmem>>, %arg7: memref<8x160xbf16, #tpu.memory_space<vmem>>) attributes {dimension_semantics = [], scalar_prefetch = 0 : i64, scratch_operands = 1 : i64, tpu.core_type = #tpu.core_type<tc>} {
    %c0 = arith.constant 0 : index
    %c0_0 = arith.constant 0 : index
    %0 = vector.load %arg0[%c0, %c0_0] : memref<8x128xf32, #tpu.memory_space<vmem>>, vector<8x128xf32>
    %1 = arith.truncf %0 : vector<8x128xf32> to vector<8x128xbf16>
    %c0_1 = arith.constant 0 : index
    %c0_2 = arith.constant 0 : index
    %2 = vector.load %arg7[%c0_1, %c0_2] : memref<8x160xbf16, #tpu.memory_space<vmem>>, vector<8x128xbf16>
    tpu.vector_store %arg7[%c0_1, %c0_2], %1 {strides = array<i32>} : memref<8x160xbf16, #tpu.memory_space<vmem>>, vector<8x128xbf16>,
    %3 = tpu.iota {dimensions = array<i32: 1>} : vector<8x128xi32>
    %c64_i32 = arith.constant 64 : i32
    %4 = vector.broadcast %c64_i32 : i32 to vector<8x128xi32>
    %5 = arith.cmpi sge, %3, %4 : vector<8x128xi32>
    %c96_i32 = arith.constant 96 : i32
    %6 = vector.broadcast %c96_i32 : i32 to vector<8x128xi32>
    %7 = arith.cmpi slt, %3, %6 : vector<8x128xi32>
    %8 = arith.andi %5, %7 : vector<8x128xi1>
    %c0_i32 = arith.constant 0 : i32
    %9 = arith.index_cast %c0_i32 : i32 to index
    %c0_3 = arith.constant 0 : index
    %c0_4 = arith.constant 0 : index
    %10 = vector.load %arg1[%9, %c0_3, %c0_4] : memref<2x8x32xf32, #tpu.memory_space<vmem>>, vector<1x8x32xf32>
    %11 = vector.shape_cast %10 : vector<1x8x32xf32> to vector<8x32xf32>
    %12 = arith.truncf %11 : vector<8x32xf32> to vector<8x32xbf16>
    %c0_5 = arith.constant 0 : index
    %c128 = arith.constant 128 : index
    %13 = vector.load %arg7[%c0_5, %c128] : memref<8x160xbf16, #tpu.memory_space<vmem>>, vector<8x32xbf16>
    tpu.vector_store %arg7[%c0_5, %c128], %12 {strides = array<i32>} : memref<8x160xbf16, #tpu.memory_space<vmem>>, vector<8x32xbf16>,
    %c0_6 = arith.constant 0 : index
    %c0_7 = arith.constant 0 : index
    %14 = vector.load %arg7[%c0_6, %c0_7] : memref<8x160xbf16, #tpu.memory_space<vmem>>, vector<8x160xbf16>
    %15 = arith.index_cast %c0_i32 : i32 to index
    %c0_8 = arith.constant 0 : index
    %c0_9 = arith.constant 0 : index
    %16 = vector.load %arg3[%15, %c0_8, %c0_9] : memref<2x160x128xbf16, #tpu.memory_space<vmem>>, vector<1x160x128xbf16>
    %17 = vector.shape_cast %16 : vector<1x160x128xbf16> to vector<160x128xbf16>
    %cst = arith.constant dense<0.000000e+00> : vector<8x128xf32>
    %18 = tpu.matmul %14, %17, %cst {dimension_numbers = #tpu.dot_dimension_numbers<[1], [0], [0], [1], [0, 0, 1, 1], [], []>} : vector<8x160xbf16>, vector<160x128xbf16>, vector<8x128xf32> -> vector<8x128xf32>
    %19 = arith.index_cast %c0_i32 : i32 to index
    %c0_10 = arith.constant 0 : index
    %c0_11 = arith.constant 0 : index
    %20 = vector.load %arg4[%19, %c0_10, %c0_11] : memref<2x1x128xf32, #tpu.memory_space<vmem>>, vector<1x1x128xf32>
    %21 = vector.shape_cast %20 : vector<1x1x128xf32> to vector<1x128xf32>
    %22 = vector.broadcast %21 : vector<1x128xf32> to vector<8x128xf32>
    %23 = arith.addf %18, %22 : vector<8x128xf32>
    %cst_12 = arith.constant 5.000000e-01 : f32
    %24 = vector.broadcast %cst_12 : f32 to vector<8x128xf32>
    %25 = arith.mulf %24, %23 : vector<8x128xf32>
    %26 = arith.select %8, %23, %25 : vector<8x128xi1>, vector<8x128xf32>
    %27 = math.tanh %26 : vector<8x128xf32>
    %cst_13 = arith.constant 5.000000e-01 : f32
    %28 = vector.broadcast %cst_13 : f32 to vector<8x128xf32>
    %29 = arith.mulf %28, %27 : vector<8x128xf32>
    %cst_14 = arith.constant 5.000000e-01 : f32
    %30 = vector.broadcast %cst_14 : f32 to vector<8x128xf32>
    %31 = arith.addf %29, %30 : vector<8x128xf32>
    %32 = arith.select %8, %27, %31 : vector<8x128xi1>, vector<8x128xf32>
    %33 = vector.extract_strided_slice %32 {offsets = [0, 0], sizes = [8, 32], strides = [1, 1]} : vector<8x128xf32> to vector<8x32xf32>
    %34 = vector.extract_strided_slice %32 {offsets = [0, 32], sizes = [8, 32], strides = [1, 1]} : vector<8x128xf32> to vector<8x32xf32>
    %35 = vector.extract_strided_slice %32 {offsets = [0, 64], sizes = [8, 32], strides = [1, 1]} : vector<8x128xf32> to vector<8x32xf32>
    %36 = vector.extract_strided_slice %32 {offsets = [0, 96], sizes = [8, 32], strides = [1, 1]} : vector<8x128xf32> to vector<8x32xf32>
    %37 = arith.index_cast %c0_i32 : i32 to index
    %c0_15 = arith.constant 0 : index
    %c0_16 = arith.constant 0 : index
    %38 = vector.load %arg2[%37, %c0_15, %c0_16] : memref<2x8x32xf32, #tpu.memory_space<vmem>>, vector<1x8x32xf32>
    %39 = vector.shape_cast %38 : vector<1x8x32xf32> to vector<8x32xf32>
    %40 = arith.mulf %34, %39 : vector<8x32xf32>
    %41 = arith.mulf %33, %35 : vector<8x32xf32>
    %42 = arith.addf %40, %41 : vector<8x32xf32>
    %43 = math.tanh %42 : vector<8x32xf32>
    %44 = arith.mulf %36, %43 : vector<8x32xf32>
    %45 = arith.index_cast %c0_i32 : i32 to index
    %c0_17 = arith.constant 0 : index
    %c0_18 = arith.constant 0 : index
    %46 = vector.load %arg5[%45, %c0_17, %c0_18] : memref<2x8x32xf32, #tpu.memory_space<vmem>>, vector<1x8x32xf32>
    %47 = vector.shape_cast %46 : vector<1x8x32xf32> to vector<8x32xf32>
    %48 = vector.shape_cast %44 : vector<8x32xf32> to vector<1x8x32xf32>
    tpu.vector_store %arg5[%45, %c0_17, %c0_18], %48 {strides = array<i32>} : memref<2x8x32xf32, #tpu.memory_space<vmem>>, vector<1x8x32xf32>,
    %49 = arith.index_cast %c0_i32 : i32 to index
    %c0_19 = arith.constant 0 : index
    %c0_20 = arith.constant 0 : index
    %50 = vector.load %arg6[%49, %c0_19, %c0_20] : memref<2x8x32xf32, #tpu.memory_space<vmem>>, vector<1x8x32xf32>
    %51 = vector.shape_cast %50 : vector<1x8x32xf32> to vector<8x32xf32>
    %52 = vector.shape_cast %42 : vector<8x32xf32> to vector<1x8x32xf32>
    tpu.vector_store %arg6[%49, %c0_19, %c0_20], %52 {strides = array<i32>} : memref<2x8x32xf32, #tpu.memory_space<vmem>>, vector<1x8x32xf32>,
    %53 = arith.truncf %44 : vector<8x32xf32> to vector<8x32xbf16>
    %c0_21 = arith.constant 0 : index
    %c0_22 = arith.constant 0 : index
    %54 = vector.load %arg7[%c0_21, %c0_22] : memref<8x160xbf16, #tpu.memory_space<vmem>>, vector<8x32xbf16>
    tpu.vector_store %arg7[%c0_21, %c0_22], %53 {strides = array<i32>} : memref<8x160xbf16, #tpu.memory_space<vmem>>, vector<8x32xbf16>,
    %c1_i32 = arith.constant 1 : i32
    %55 = arith.index_cast %c1_i32 : i32 to index
    %c0_23 = arith.constant 0 : index
    %c0_24 = arith.constant 0 : index
    %56 = vector.load %arg1[%55, %c0_23, %c0_24] : memref<2x8x32xf32, #tpu.memory_space<vmem>>, vector<1x8x32xf32>
    %57 = vector.shape_cast %56 : vector<1x8x32xf32> to vector<8x32xf32>
    %58 = arith.truncf %57 : vector<8x32xf32> to vector<8x32xbf16>
    %c0_25 = arith.constant 0 : index
    %c128_26 = arith.constant 128 : index
    %59 = vector.load %arg7[%c0_25, %c128_26] : memref<8x160xbf16, #tpu.memory_space<vmem>>, vector<8x32xbf16>
    tpu.vector_store %arg7[%c0_25, %c128_26], %58 {strides = array<i32>} : memref<8x160xbf16, #tpu.memory_space<vmem>>, vector<8x32xbf16>,
    %c0_27 = arith.constant 0 : index
    %c0_28 = arith.constant 0 : index
    %60 = vector.load %arg7[%c0_27, %c0_28] : memref<8x160xbf16, #tpu.memory_space<vmem>>, vector<8x160xbf16>
    %61 = arith.index_cast %c1_i32 : i32 to index
    %c0_29 = arith.constant 0 : index
    %c0_30 = arith.constant 0 : index
    %62 = vector.load %arg3[%61, %c0_29, %c0_30] : memref<2x160x128xbf16, #tpu.memory_space<vmem>>, vector<1x160x128xbf16>
    %63 = vector.shape_cast %62 : vector<1x160x128xbf16> to vector<160x128xbf16>
    %cst_31 = arith.constant dense<0.000000e+00> : vector<8x128xf32>
    %64 = tpu.matmul %60, %63, %cst_31 {dimension_numbers = #tpu.dot_dimension_numbers<[1], [0], [0], [1], [0, 0, 1, 1], [], []>} : vector<8x160xbf16>, vector<160x128xbf16>, vector<8x128xf32> -> vector<8x128xf32>
    %65 = arith.index_cast %c1_i32 : i32 to index
    %c0_32 = arith.constant 0 : index
    %c0_33 = arith.constant 0 : index
    %66 = vector.load %arg4[%65, %c0_32, %c0_33] : memref<2x1x128xf32, #tpu.memory_space<vmem>>, vector<1x1x128xf32>
    %67 = vector.shape_cast %66 : vector<1x1x128xf32> to vector<1x128xf32>
    %68 = vector.broadcast %67 : vector<1x128xf32> to vector<8x128xf32>
    %69 = arith.addf %64, %68 : vector<8x128xf32>
    %cst_34 = arith.constant 5.000000e-01 : f32
    %70 = vector.broadcast %cst_34 : f32 to vector<8x128xf32>
    %71 = arith.mulf %70, %69 : vector<8x128xf32>
    %72 = arith.select %8, %69, %71 : vector<8x128xi1>, vector<8x128xf32>
    %73 = math.tanh %72 : vector<8x128xf32>
    %cst_35 = arith.constant 5.000000e-01 : f32
    %74 = vector.broadcast %cst_35 : f32 to vector<8x128xf32>
    %75 = arith.mulf %74, %73 : vector<8x128xf32>
    %cst_36 = arith.constant 5.000000e-01 : f32
    %76 = vector.broadcast %cst_36 : f32 to vector<8x128xf32>
    %77 = arith.addf %75, %76 : vector<8x128xf32>
    %78 = arith.select %8, %73, %77 : vector<8x128xi1>, vector<8x128xf32>
    %79 = vector.extract_strided_slice %78 {offsets = [0, 0], sizes = [8, 32], strides = [1, 1]} : vector<8x128xf32> to vector<8x32xf32>
    %80 = vector.extract_strided_slice %78 {offsets = [0, 32], sizes = [8, 32], strides = [1, 1]} : vector<8x128xf32> to vector<8x32xf32>
    %81 = vector.extract_strided_slice %78 {offsets = [0, 64], sizes = [8, 32], strides = [1, 1]} : vector<8x128xf32> to vector<8x32xf32>
    %82 = vector.extract_strided_slice %78 {offsets = [0, 96], sizes = [8, 32], strides = [1, 1]} : vector<8x128xf32> to vector<8x32xf32>
    %83 = arith.index_cast %c1_i32 : i32 to index
    %c0_37 = arith.constant 0 : index
    %c0_38 = arith.constant 0 : index
    %84 = vector.load %arg2[%83, %c0_37, %c0_38] : memref<2x8x32xf32, #tpu.memory_space<vmem>>, vector<1x8x32xf32>
    %85 = vector.shape_cast %84 : vector<1x8x32xf32> to vector<8x32xf32>
    %86 = arith.mulf %80, %85 : vector<8x32xf32>
    %87 = arith.mulf %79, %81 : vector<8x32xf32>
    %88 = arith.addf %86, %87 : vector<8x32xf32>
    %89 = math.tanh %88 : vector<8x32xf32>
    %90 = arith.mulf %82, %89 : vector<8x32xf32>
    %91 = arith.index_cast %c1_i32 : i32 to index
    %c0_39 = arith.constant 0 : index
    %c0_40 = arith.constant 0 : index
    %92 = vector.load %arg5[%91, %c0_39, %c0_40] : memref<2x8x32xf32, #tpu.memory_space<vmem>>, vector<1x8x32xf32>
    %93 = vector.shape_cast %92 : vector<1x8x32xf32> to vector<8x32xf32>
    %94 = vector.shape_cast %90 : vector<8x32xf32> to vector<1x8x32xf32>
    tpu.vector_store %arg5[%91, %c0_39, %c0_40], %94 {strides = array<i32>} : memref<2x8x32xf32, #tpu.memory_space<vmem>>, vector<1x8x32xf32>,
    %95 = arith.index_cast %c1_i32 : i32 to index
    %c0_41 = arith.constant 0 : index
    %c0_42 = arith.constant 0 : index
    %96 = vector.load %arg6[%95, %c0_41, %c0_42] : memref<2x8x32xf32, #tpu.memory_space<vmem>>, vector<1x8x32xf32>
    %97 = vector.shape_cast %96 : vector<1x8x32xf32> to vector<8x32xf32>
    %98 = vector.shape_cast %88 : vector<8x32xf32> to vector<1x8x32xf32>
    tpu.vector_store %arg6[%95, %c0_41, %c0_42], %98 {strides = array<i32>} : memref<2x8x32xf32, #tpu.memory_space<vmem>>, vector<1x8x32xf32>,
    %99 = arith.truncf %90 : vector<8x32xf32> to vector<8x32xbf16>
    %c0_43 = arith.constant 0 : index
    %c0_44 = arith.constant 0 : index
    %100 = vector.load %arg7[%c0_43, %c0_44] : memref<8x160xbf16, #tpu.memory_space<vmem>>, vector<8x32xbf16>
    tpu.vector_store %arg7[%c0_43, %c0_44], %99 {strides = array<i32>} : memref<8x160xbf16, #tpu.memory_space<vmem>>, vector<8x32xbf16>,
    %c2_i32 = arith.constant 2 : i32
    return
  }
}

</mosaic_0001>

<llo_original>
// kernel: lstm_controller_forward.1
$region0: #{lstm_controller_forward.1}
  #allocation0 [shape = 'u32[]', space=smem, size = 0x4, offset = 0x4, fixed_abs, tag = 'smem constant byte address 0x4 - core index']
  #allocation1 [shape = 'u32[144,128]{1,0:T(1,128)}', space=vmem, size = 0x12000, scoped, tag = 'internal scratch']
  #allocation2 [shape = 'bf16[8,160]{1,0:T(8,128)(2,1)}', space=vmem, size = 0x1000, scoped, tag = 'scratch operand']
  %s0 = inlined_call_operand.vmem [shape: f32[8,128], index: 0, kind: input, shape index: {}]
  %s1 = inlined_call_operand.vmem [shape: f32[2,8,32], index: 1, kind: input, shape index: {}, may-alias: {1,5}]
  %s2 = inlined_call_operand.hbm [shape: f32[2,8,32], index: 2, kind: input, shape index: {}, may-alias: {2,6}]
  %s3 = inlined_call_operand.hbm [shape: bf16[2,160,128], index: 3, kind: input, shape index: {}]
  %s4 = inlined_call_operand.vmem [shape: f32[2,1,128], index: 4, kind: input, shape index: {}]
  %s5 = inlined_call_operand.vmem [shape: f32[2,8,32], index: 5, kind: output, shape index: {0}, may-alias: {1,5}]
  %s6 = inlined_call_operand.hbm [shape: f32[2,8,32], index: 6, kind: output, shape index: {1}, may-alias: {2,6}]
  %7 = xla_tuple %s5, %s6
  %s8 = sld [smem:[#allocation0]]
  $region46: #{lstm_controller_forward.1} parent=0
    _
  %s10 = ssub.s32 1, %s8
  %s11 = scalar_select 0, %s10, %s8
  $region1: #{lstm_controller_forward.1} parent=0
    #allocation3 [shape = 'u8[8192]{0}', space=vmem, size = 0x2000, scoped, tag = 'input window, operand 2, single buffered']
    #allocation4 [shape = 's32[1]{0}', space=sflag, size = 0x4, scoped, tag = 'scoped memory for lstm_controller_forward.1']
    #allocation5 [shape = 's32[1]{0}', space=sflag, size = 0x4, scoped, tag = 'scoped memory for lstm_controller_forward.1']
    #allocation6 [shape = 'u8[81920]{0}', space=vmem, size = 0x14000, scoped, tag = 'input window, operand 3, single buffered']
    #allocation7 [shape = 's32[1]{0}', space=sflag, size = 0x4, scoped, tag = 'scoped memory for lstm_controller_forward.1']
    #allocation8 [shape = 'u8[8192]{0}', space=vmem, size = 0x2000, scoped, tag = 'output window, operand 1, single buffered']
    %12 = vsyncpa [#allocation4], 0
    %13 = vsyncpa [#allocation7], 0
    %14 = vsyncpa [#allocation5], 0
    // Predicated region
    $region2: #{lstm_controller_forward.1} parent=1 // pred_check
      _
    $region3: #{lstm_controller_forward.1} parent=1 // pred_check_branch
      %16 = sbr.rel (0) target = $region5
    $region4: #{lstm_controller_forward.1} parent=1 // pred_region
      _
    $region5: #{lstm_controller_forward.1} parent=1 // pred_fallthru
      _
    // Predicated region
    $region6: #{lstm_controller_forward.1} parent=1 // pred_check
      _
    $region7: #{lstm_controller_forward.1} parent=1 // pred_check_branch
      %18 = sbr.rel (0) target = $region9
    $region8: #{lstm_controller_forward.1} parent=1 // pred_region
      _
    $region9: #{lstm_controller_forward.1} parent=1 // pred_fallthru
      _
    // Predicated region
    $region10: #{lstm_controller_forward.1} parent=1 // pred_check
      _
    $region11: #{lstm_controller_forward.1} parent=1 // pred_check_branch
      %20 = sbr.rel (0) target = $region13
    $region12: #{lstm_controller_forward.1} parent=1 // pred_region
      %s22 = ssub.s32 256, 256
      %23 = vsyncadd [#allocation4], %s22
      %s24 = sshll.u32 [#allocation3], 4
      %s25 = int_to_ptr.vmem [resolvable:$true] %s24
      %30 = dma.hbm_to_vmem [thread:$0]  %s2, 256, %s25, [#allocation4], 128, 128, 8
    $region13: #{lstm_controller_forward.1} parent=1 // pred_fallthru
      _
    // Predicated region
    $region14: #{lstm_controller_forward.1} parent=1 // pred_check
      _
    $region15: #{lstm_controller_forward.1} parent=1 // pred_check_branch
      %32 = sbr.rel (0) target = $region17
    $region16: #{lstm_controller_forward.1} parent=1 // pred_region
      %s34 = ssub.s32 2560, 2560
      %35 = vsyncadd [#allocation7], %s34
      %s36 = sshll.u32 [#allocation6], 4
      %s37 = int_to_ptr.vmem [resolvable:$true] %s36
      %42 = dma.hbm_to_vmem [thread:$0]  %s3, 2560, %s37, [#allocation7], 64, 64, 4
    $region17: #{lstm_controller_forward.1} parent=1 // pred_fallthru
      _
    // Predicated region
    $region18: #{lstm_controller_forward.1} parent=1 // pred_check
      _
    $region19: #{lstm_controller_forward.1} parent=1 // pred_check_branch
      %44 = sbr.rel (0) target = $region21
    $region20: #{lstm_controller_forward.1} parent=1 // pred_region
      _
    $region21: #{lstm_controller_forward.1} parent=1 // pred_fallthru
      _
    // Predicated region
    $region22: #{lstm_controller_forward.1} parent=1 // pred_check
      _
    $region23: #{lstm_controller_forward.1} parent=1 // pred_check_branch
      %46 = sbr.rel (0) target = $region25
    $region24: #{lstm_controller_forward.1} parent=1 // pred_region
      %47 = dma.done [#allocation4], 256
    $region25: #{lstm_controller_forward.1} parent=1 // pred_fallthru
      _
    // Predicated region
    $region26: #{lstm_controller_forward.1} parent=1 // pred_check
      _
    $region27: #{lstm_controller_forward.1} parent=1 // pred_check_branch
      %49 = sbr.rel (0) target = $region29
    $region28: #{lstm_controller_forward.1} parent=1 // pred_region
      %50 = dma.done [#allocation7], 2560
    $region29: #{lstm_controller_forward.1} parent=1 // pred_fallthru
      _
    %v52 = vld [vmem:[%s0] sm:$0xff]
    %v53 = vpack.c.bf16 %v52, %v52
    %54 = vst [vmem:[#allocation2] sm:$0xf] %v53
    %v55 = vlaneseq
    %v56 = vand.u32 %v55, 127
    %vm57 = vcmp.ge.s32.totalorder %v56, 64
    %vm58 = vcmp.lt.s32.totalorder %v56, 96
    %vm59 = vmand %vm57, %vm58
    %v60 = vld [vmem:[%s1] sm:$0xff]
    %v61 = vpack.c.bf16 %v60, %v60
    %vm62 = vcmask 257024
    %63 = vst.msk [vmem:[#allocation2 + $0x4] sm:$0xf] %vm62, %v61
    %v64 = vld [vmem:[#allocation2] sm:$0xff]
    %v65 = vld [vmem:[#allocation6] sm:$0xf]
    %v66 = vld [vmem:[#allocation6 + $0x4] sm:$0xf]
    %v67 = vld [vmem:[#allocation6 + $0x8] sm:$0xf]
    %v68 = vld [vmem:[#allocation6 + $0xc] sm:$0xf]
    %v69 = vld [vmem:[#allocation6 + $0x10] sm:$0xf]
    %v70 = vld [vmem:[#allocation6 + $0x14] sm:$0xf]
    %v71 = vld [vmem:[#allocation6 + $0x18] sm:$0xf]
    %v72 = vld [vmem:[#allocation6 + $0x1c] sm:$0xf]
    %v73 = vld [vmem:[#allocation6 + $0x20] sm:$0xf]
    %v74 = vld [vmem:[#allocation6 + $0x24] sm:$0xf]
    %v75 = vld [vmem:[#allocation6 + $0x28] sm:$0xf]
    %v76 = vld [vmem:[#allocation6 + $0x2c] sm:$0xf]
    %v77 = vld [vmem:[#allocation6 + $0x30] sm:$0xf]
    %v78 = vld [vmem:[#allocation6 + $0x34] sm:$0xf]
    %v79 = vld [vmem:[#allocation6 + $0x38] sm:$0xf]
    %v80 = vld [vmem:[#allocation6 + $0x3c] sm:$0xf]
    %v81 = vld [vmem:[#allocation6 + $0x40] sm:$0xf]
    %v82 = vld [vmem:[#allocation6 + $0x44] sm:$0xf]
    %v83 = vld [vmem:[#allocation6 + $0x48] sm:$0xf]
    %v84 = vld [vmem:[#allocation6 + $0x4c] sm:$0xf]
    %v85 = vld [vmem:[%s4] sm:$0x1]
    %v87 = vlaneseq
    %v88 = vshrl.u32 %v87, 7
    %v89 = vsub.s32 0, %v88
    %v90 = vrot.slane %v85, %v89
    %v93 = vunpack.c.l.b16 %v64
    %v94 = vunpack.c.h.b16 %v64
    %v95 = vpack.c.b16 %v93, %v93
    %v96 = vpack.c.b16 %v94, %v94
    %v118 = vunpack.c.l.b16 %v65
    %v119 = vunpack.c.l.b16 %v66
    %v120 = vunpack.c.l.b16 %v67
    %v121 = vunpack.c.l.b16 %v68
    %v122 = vunpack.c.l.b16 %v69
    %v123 = vunpack.c.l.b16 %v70
    %v124 = vunpack.c.l.b16 %v71
    %v125 = vunpack.c.l.b16 %v72
    %v126 = vunpack.c.l.b16 %v73
    %v127 = vunpack.c.l.b16 %v74
    %v128 = vunpack.c.l.b16 %v75
    %v129 = vunpack.c.l.b16 %v76
    %v130 = vunpack.c.l.b16 %v77
    %v131 = vunpack.c.l.b16 %v78
    %v132 = vunpack.c.l.b16 %v79
    %v133 = vunpack.c.l.b16 %v80
    %v134 = vunpack.c.l.b16 %v81
    %v135 = vunpack.c.l.b16 %v82
    %v136 = vunpack.c.l.b16 %v83
    %v137 = vunpack.c.l.b16 %v84
    %v138 = vpack.c.b16 %v119, %v118
    %v139 = vpack.c.b16 %v121, %v120
    %v140 = vpack.c.b16 %v123, %v122
    %v141 = vpack.c.b16 %v125, %v124
    %v142 = vpack.c.b16 %v127, %v126
    %v143 = vpack.c.b16 %v129, %v128
    %v144 = vpack.c.b16 %v131, %v130
    %v145 = vpack.c.b16 %v133, %v132
    %v146 = vpack.c.b16 %v135, %v134
    %v147 = vpack.c.b16 %v137, %v136
    %vm158 = vcmask 261120
    %v160 = vsel %vm158, %v96, 0
    %162 = vmatprep.subr.bf16.mxu0 0
    %163 = vmatpush1.bf16.msra.mxu0 %v145
    %164 = vmatprep.subr.bf16.mxu0 0
    %165 = vmatpush1.bf16.msra.mxu0 %v144
    %166 = vmatprep.subr.bf16.mxu0 0
    %167 = vmatpush1.bf16.msra.mxu0 %v143
    %168 = vmatprep.subr.bf16.mxu0 0
    %169 = vmatpush1.bf16.msra.mxu0 %v142
    %170 = vmatprep.subr.bf16.mxu0 0
    %171 = vmatpush1.bf16.msra.mxu0 %v141
    %172 = vmatprep.subr.bf16.mxu0 0
    %173 = vmatpush1.bf16.msra.mxu0 %v140
    %174 = vmatprep.subr.bf16.mxu0 0
    %175 = vmatpush1.bf16.msra.mxu0 %v139
    %176 = vmatprep.subr.bf16.mxu0 0
    %177 = vmatpush1.bf16.msra.mxu0 %v138
    %178 = vmatprep.subr.bf16.mxu0 0
    %179 = vmatpush2.bf16.msra.mxu0 0
    %180 = vmatprep.subr.bf16.mxu0 0
    %181 = vmatpush2.bf16.msra.mxu0 0
    %182 = vmatprep.subr.bf16.mxu0 0
    %183 = vmatpush2.bf16.msra.mxu0 0
    %184 = vmatprep.subr.bf16.mxu0 0
    %185 = vmatpush2.bf16.msra.mxu0 0
    %186 = vmatprep.subr.bf16.mxu0 0
    %187 = vmatpush2.bf16.msra.mxu0 0
    %188 = vmatprep.subr.bf16.mxu0 0
    %189 = vmatpush2.bf16.msra.mxu0 0
    %190 = vmatprep.subr.bf16.mxu0 0
    %191 = vmatpush2.bf16.msra.mxu0 %v147
    %192 = vmatprep.subr.bf16.mxu0 0
    %193 = vmatpush2.bf16.msra.mxu0 %v146
    %194 = vmatprep.mubr.bf16.mxu0 %v160
    %195 = vmatmul.mubr.bf16.gmra.mxu0 %v95
    %v196 = vpop.f32.mrf.mxu0
    %v197 = vadd.f32 %v90, %v196
    %v198 = vpop.f32.mrf.mxu0
    %v199 = vpop.f32.mrf.mxu0
    %v200 = vpop.f32.mrf.mxu0
    %201 = vdwg.mxu0
    %v202 = vmul.f32 %v197, 0.5
    %v203 = vsel %vm59, %v197, %v202
    %v204 = vtanh.pop %v203
    %v205 = vmul.f32 %v204, 0.5
    %v206 = vadd.f32 %v205, 0.5
    %v207 = vsel %vm59, %v204, %v206
    %v208 = vld [vmem:[#allocation3] sm:$0xff]
    %210 = vrot.lane.b32.xlu0 %v208, 32
    %v211 = vpop.permute.xlu0 %210
    %v213 = vmul.f32 %v207, %v211
    %215 = vrot.lane.b32.xlu0 %v207, 64
    %v216 = vpop.permute.xlu0 %215
    %v218 = vmul.f32 %v207, %v216
    %220 = vrot.lane.b32.xlu0 %v218, 32
    %v221 = vpop.permute.xlu0 %220
    %v223 = vadd.f32 %v213, %v221
    %v224 = vtanh.pop %v223
    %226 = vrot.lane.b32.xlu0 %v224, 64
    %v227 = vpop.permute.xlu0 %226
    %v229 = vmul.f32 %v207, %v227
    %231 = vrot.lane.b32.xlu0 %v229, 32
    %v232 = vpop.permute.xlu0 %231
    %234 = vst.msk [vmem:[%s5] sm:$0xff] %vm158, %v232
    %236 = vrot.lane.b32.xlu0 %v223, 96
    %v237 = vpop.permute.xlu0 %236
    %239 = vst.msk [vmem:[#allocation8] sm:$0xff] %vm158, %v237
    %v240 = vpack.c.bf16 %v229, %v229
    %v242 = vunpack.c.l.b16 %v240
    %v243 = vpack.c.b16 %v242, %v242
    %244 = vrot.lane.b32.xlu0 %v243, 32
    %v245 = vpop.permute.xlu0 %244
    %247 = vst.msk [vmem:[#allocation2] sm:$0xf] %vm62, %v245
    %s248 = scalar_lea.vmem %s1, 8
    %v249 = vld [vmem:[%s248] sm:$0xff]
    %v250 = vpack.c.bf16 %v249, %v249
    %251 = vst.msk [vmem:[#allocation2 + $0x4] sm:$0xf] %vm62, %v250
    %v252 = vld [vmem:[#allocation2] sm:$0xff]
    %s253 = scalar_lea.vmem [#allocation6], 80
    %v254 = vld [vmem:[%s253] sm:$0xf]
    %v255 = vld [vmem:[%s253 + $0x4] sm:$0xf]
    %v256 = vld [vmem:[%s253 + $0x8] sm:$0xf]
    %v257 = vld [vmem:[%s253 + $0xc] sm:$0xf]
    %v258 = vld [vmem:[%s253 + $0x10] sm:$0xf]
    %v259 = vld [vmem:[%s253 + $0x14] sm:$0xf]
    %v260 = vld [vmem:[%s253 + $0x18] sm:$0xf]
    %v261 = vld [vmem:[%s253 + $0x1c] sm:$0xf]
    %v262 = vld [vmem:[%s253 + $0x20] sm:$0xf]
    %v263 = vld [vmem:[%s253 + $0x24] sm:$0xf]
    %v264 = vld [vmem:[%s253 + $0x28] sm:$0xf]
    %v265 = vld [vmem:[%s253 + $0x2c] sm:$0xf]
    %v266 = vld [vmem:[%s253 + $0x30] sm:$0xf]
    %v267 = vld [vmem:[%s253 + $0x34] sm:$0xf]
    %v268 = vld [vmem:[%s253 + $0x38] sm:$0xf]
    %v269 = vld [vmem:[%s253 + $0x3c] sm:$0xf]
    %v270 = vld [vmem:[%s253 + $0x40] sm:$0xf]
    %v271 = vld [vmem:[%s253 + $0x44] sm:$0xf]
    %v272 = vld [vmem:[%s253 + $0x48] sm:$0xf]
    %v273 = vld [vmem:[%s253 + $0x4c] sm:$0xf]
    %s274 = scalar_lea.vmem %s4, 1
    %v275 = vld [vmem:[%s274] sm:$0x1]
    %v277 = vlaneseq
    %v278 = vshrl.u32 %v277, 7
    %v279 = vsub.s32 0, %v278
    %v280 = vrot.slane %v275, %v279
    %v283 = vunpack.c.l.b16 %v252
    %v284 = vunpack.c.h.b16 %v252
    %v285 = vpack.c.b16 %v283, %v283
    %v286 = vpack.c.b16 %v284, %v284
    %v308 = vunpack.c.l.b16 %v254
    %v309 = vunpack.c.l.b16 %v255
    %v310 = vunpack.c.l.b16 %v256
    %v311 = vunpack.c.l.b16 %v257
    %v312 = vunpack.c.l.b16 %v258
    %v313 = vunpack.c.l.b16 %v259
    %v314 = vunpack.c.l.b16 %v260
    %v315 = vunpack.c.l.b16 %v261
    %v316 = vunpack.c.l.b16 %v262
    %v317 = vunpack.c.l.b16 %v263
    %v318 = vunpack.c.l.b16 %v264
    %v319 = vunpack.c.l.b16 %v265
    %v320 = vunpack.c.l.b16 %v266
    %v321 = vunpack.c.l.b16 %v267
    %v322 = vunpack.c.l.b16 %v268
    %v323 = vunpack.c.l.b16 %v269
    %v324 = vunpack.c.l.b16 %v270
    %v325 = vunpack.c.l.b16 %v271
    %v326 = vunpack.c.l.b16 %v272
    %v327 = vunpack.c.l.b16 %v273
    %v328 = vpack.c.b16 %v309, %v308
    %v329 = vpack.c.b16 %v311, %v310
    %v330 = vpack.c.b16 %v313, %v312
    %v331 = vpack.c.b16 %v315, %v314
    %v332 = vpack.c.b16 %v317, %v316
    %v333 = vpack.c.b16 %v319, %v318
    %v334 = vpack.c.b16 %v321, %v320
    %v335 = vpack.c.b16 %v323, %v322
    %v336 = vpack.c.b16 %v325, %v324
    %v337 = vpack.c.b16 %v327, %v326
    %v349 = vsel %vm158, %v286, 0
    %351 = vmatprep.subr.bf16.mxu0 0
    %352 = vmatpush1.bf16.msra.mxu0 %v335
    %353 = vmatprep.subr.bf16.mxu0 0
    %354 = vmatpush1.bf16.msra.mxu0 %v334
    %355 = vmatprep.subr.bf16.mxu0 0
    %356 = vmatpush1.bf16.msra.mxu0 %v333
    %357 = vmatprep.subr.bf16.mxu0 0
    %358 = vmatpush1.bf16.msra.mxu0 %v332
    %359 = vmatprep.subr.bf16.mxu0 0
    %360 = vmatpush1.bf16.msra.mxu0 %v331
    %361 = vmatprep.subr.bf16.mxu0 0
    %362 = vmatpush1.bf16.msra.mxu0 %v330
    %363 = vmatprep.subr.bf16.mxu0 0
    %364 = vmatpush1.bf16.msra.mxu0 %v329
    %365 = vmatprep.subr.bf16.mxu0 0
    %366 = vmatpush1.bf16.msra.mxu0 %v328
    %367 = vmatprep.subr.bf16.mxu0 0
    %368 = vmatpush2.bf16.msra.mxu0 0
    %369 = vmatprep.subr.bf16.mxu0 0
    %370 = vmatpush2.bf16.msra.mxu0 0
    %371 = vmatprep.subr.bf16.mxu0 0
    %372 = vmatpush2.bf16.msra.mxu0 0
    %373 = vmatprep.subr.bf16.mxu0 0
    %374 = vmatpush2.bf16.msra.mxu0 0
    %375 = vmatprep.subr.bf16.mxu0 0
    %376 = vmatpush2.bf16.msra.mxu0 0
    %377 = vmatprep.subr.bf16.mxu0 0
    %378 = vmatpush2.bf16.msra.mxu0 0
    %379 = vmatprep.subr.bf16.mxu0 0
    %380 = vmatpush2.bf16.msra.mxu0 %v337
    %381 = vmatprep.subr.bf16.mxu0 0
    %382 = vmatpush2.bf16.msra.mxu0 %v336
    %383 = vmatprep.mubr.bf16.mxu0 %v349
    %384 = vmatmul.mubr.bf16.gmra.mxu0 %v285
    %v385 = vpop.f32.mrf.mxu0
    %v386 = vadd.f32 %v280, %v385
    %v387 = vpop.f32.mrf.mxu0
    %v388 = vpop.f32.mrf.mxu0
    %v389 = vpop.f32.mrf.mxu0
    %390 = vdwg.mxu0
    %v391 = vmul.f32 %v386, 0.5
    %v392 = vsel %vm59, %v386, %v391
    %v393 = vtanh.pop %v392
    %v394 = vmul.f32 %v393, 0.5
    %v395 = vadd.f32 %v394, 0.5
    %v396 = vsel %vm59, %v393, %v395
    %s397 = scalar_lea.vmem [#allocation3], 8
    %v398 = vld [vmem:[%s397] sm:$0xff]
    %400 = vrot.lane.b32.xlu0 %v398, 32
    %v401 = vpop.permute.xlu0 %400
    %v403 = vmul.f32 %v396, %v401
    %405 = vrot.lane.b32.xlu0 %v396, 64
    %v406 = vpop.permute.xlu0 %405
    %v408 = vmul.f32 %v396, %v406
    %410 = vrot.lane.b32.xlu0 %v408, 32
    %v411 = vpop.permute.xlu0 %410
    %v413 = vadd.f32 %v403, %v411
    %v414 = vtanh.pop %v413
    %416 = vrot.lane.b32.xlu0 %v414, 64
    %v417 = vpop.permute.xlu0 %416
    %v419 = vmul.f32 %v396, %v417
    %421 = vrot.lane.b32.xlu0 %v419, 32
    %v422 = vpop.permute.xlu0 %421
    %s424 = scalar_lea.vmem %s5, 8
    %425 = vst.msk [vmem:[%s424] sm:$0xff] %vm158, %v422
    %427 = vrot.lane.b32.xlu0 %v413, 96
    %v428 = vpop.permute.xlu0 %427
    %s430 = scalar_lea.vmem [#allocation8], 8
    %431 = vst.msk [vmem:[%s430] sm:$0xff] %vm158, %v428
    %v432 = vpack.c.bf16 %v419, %v419
    %v434 = vunpack.c.l.b16 %v432
    %v435 = vpack.c.b16 %v434, %v434
    %436 = vrot.lane.b32.xlu0 %v435, 32
    %v437 = vpop.permute.xlu0 %436
    %439 = vst.msk [vmem:[#allocation2] sm:$0xf] %vm62, %v437
    // Predicated region
    $region30: #{lstm_controller_forward.1} parent=1 // pred_check
      _
    $region31: #{lstm_controller_forward.1} parent=1 // pred_check_branch
      %441 = sbr.rel (0) target = $region33
    $region32: #{lstm_controller_forward.1} parent=1 // pred_region
      _
    $region33: #{lstm_controller_forward.1} parent=1 // pred_fallthru
      _
    // Predicated region
    $region34: #{lstm_controller_forward.1} parent=1 // pred_check
      _
    $region35: #{lstm_controller_forward.1} parent=1 // pred_check_branch
      %443 = sbr.rel (0) target = $region37
    $region36: #{lstm_controller_forward.1} parent=1 // pred_region
      %s445 = ssub.s32 256, 256
      %446 = vsyncadd [#allocation5], %s445
      %s447 = sshll.u32 [#allocation8], 4
      %s448 = int_to_ptr.vmem [resolvable:$true] %s447
      %453 = dma.vmem_to_hbm [thread:$0]  %s448, 256, %s6, [#allocation5], 128, 128, 8
    $region37: #{lstm_controller_forward.1} parent=1 // pred_fallthru
      _
    // Predicated region
    $region38: #{lstm_controller_forward.1} parent=1 // pred_check
      _
    $region39: #{lstm_controller_forward.1} parent=1 // pred_check_branch
      %455 = sbr.rel (0) target = $region41
    $region40: #{lstm_controller_forward.1} parent=1 // pred_region
      _
    $region41: #{lstm_controller_forward.1} parent=1 // pred_fallthru
      _
    // Predicated region
    $region42: #{lstm_controller_forward.1} parent=1 // pred_check
      _
    $region43: #{lstm_controller_forward.1} parent=1 // pred_check_branch
      %457 = sbr.rel (0) target = $region45
    $region44: #{lstm_controller_forward.1} parent=1 // pred_region
      %458 = dma.done [#allocation5], 256
    $region45: #{lstm_controller_forward.1} parent=1 // pred_fallthru
      _
    %459 = vsyncpa [#allocation4], 1
    %460 = vsyncpa [#allocation7], 1
    %461 = vsyncpa [#allocation5], 1

</llo_original>
